<compile_context>
chip_gen: v6e
topology: v6e:2x2x1
jax: 0.10.0
libtpu: 0.0.40
codegen_flags: <defaults>
</compile_context>

<pallas_src>
import jax
import jax.numpy as jnp
from jax.experimental import pallas as pl
from jax.experimental.pallas import tpu as pltpu


# ---------------------------------------------------------------------------
# Kernels
# ---------------------------------------------------------------------------
def _disc_kernel_resident(x_ref, w1_ref, b1_ref, w2_ref, b2_ref, o_ref):
    """One (TM, K) row-tile of the Disc MLP; W1/W2/b1/b2 VMEM-resident."""
    x = x_ref[...].astype(w1_ref.dtype)
    h = jnp.dot(x, w1_ref[...], preferred_element_type=jnp.float32)
    h = h + b1_ref[...].astype(jnp.float32)
    # LeakyReLU(0.2): single VPU max instead of compare+select+mul.
    h = jnp.maximum(h, 0.2 * h)
    out = jnp.dot(h.astype(w2_ref.dtype), w2_ref[...],
                  preferred_element_type=jnp.float32)
    o_ref[...] = (out + b2_ref[...].astype(jnp.float32)).astype(o_ref.dtype)


def _disc_kernel_ktiled(x_ref, w1_ref, b1_ref, w2_ref, b2_ref, o_ref, acc_ref):
    """K-tiled variant: grid=(M_tiles, K_tiles); W1 streamed per K step into a
    (TK, dim) block; first matmul accumulated in f32 scratch; epilogue
    (bias + LeakyReLU + second matmul + bias) runs on the last K step."""
    kk = pl.program_id(1)

    @pl.when(kk == 0)
    def _():
        acc_ref[...] = jnp.zeros_like(acc_ref)

    x = x_ref[...].astype(w1_ref.dtype)
    acc_ref[...] += jnp.dot(x, w1_ref[...], preferred_element_type=jnp.float32)

    @pl.when(kk == pl.num_programs(1) - 1)
    def _():
        h = acc_ref[...] + b1_ref[...].astype(jnp.float32)
        h = jnp.maximum(h, 0.2 * h)
        out = jnp.dot(h.astype(w2_ref.dtype), w2_ref[...],
                      preferred_element_type=jnp.float32)
        o_ref[...] = (out + b2_ref[...].astype(jnp.float32)).astype(o_ref.dtype)


# ---------------------------------------------------------------------------
# Tiling helpers
# ---------------------------------------------------------------------------
def _round_up(x, m):
    return ((x + m - 1) // m) * m


def _vmem_total_cap():
    """Conservative total VMEM budget: ~3/4 of physical capacity, clamped.
    -> ~48 MiB on v7x (64 MiB/TC), ~96 MiB on v5e/v6e (128 MiB)."""
    cap = 64 * 1024 * 1024  # conservative fallback (v7x per-TC)
    try:
        info = pltpu.get_tpu_info()
        val = getattr(info, "vmem_capacity_bytes", None)
        if val:
            cap = int(val)
    except Exception:
        pass
    return max(32 * 1024 * 1024, min((cap * 3) // 4, 100 * 1024 * 1024))


def _pick_tile_m(n_rows, per_row_bytes, budget_bytes, *, tm_max=4096):
    """Largest row tile whose pipelined per-row VMEM cost fits the budget.
    Keeps >= 2 row tiles when there are enough rows so the 'parallel' grid
    axis can shard across both TensorCores on v7x."""
    tm = (budget_bytes // max(per_row_bytes, 1)) // 8 * 8
    tm = max(8, min(tm_max, tm))
    if n_rows > 256:
        half = _round_up(-(-n_rows // 2), 8)  # cdiv(n,2) rounded up to 8
        tm = min(tm, half)
    return n_rows if n_rows <= tm else tm


def _pick_tk(k, tk_target=2048):
    """Largest multiple of 128 that divides k and is <= tk_target."""
    tk = min(k, max(128, (tk_target // 128) * 128))
    tk = (tk // 128) * 128
    while tk > 128 and k % tk != 0:
        tk -= 128
    return tk


# ---------------------------------------------------------------------------
# Forward wrapper
# ---------------------------------------------------------------------------
def disc_forward(x, w1, b1, w2, b2, *, latent_dim, use_bf16=True,
                 force_k_tiling=False, tk_target=2048):
    """Disc.forward: view(-1, latent_dim) -> Linear -> LeakyReLU(0.2)
    -> Linear -> squeeze(dim=1). Weights are (in_features, out_features).

    x is consumed in its own dtype (f32 or bf16 from the producer) with no
    wrapper-side cast or pad -> no extra HBM pass over the dominant array."""
    out_dtype = x.dtype
    x2d = jnp.reshape(x, (-1, latent_dim))        # x.view(-1, self.size)
    n, k = x2d.shape
    dim = w1.shape[1]
    nc = w2.shape[1]

    # bf16 matmul operands (accumulation stays f32 inside the kernel);
    # biases/epilogue stay f32 (no bf16 VPU on v5e).
    if use_bf16:
        w1 = w1.astype(jnp.bfloat16)
        w2 = w2.astype(jnp.bfloat16)
    b1 = jnp.reshape(b1, (1, dim)).astype(jnp.float32)
    b2 = jnp.reshape(b2, (1, nc)).astype(jnp.float32)

    x_item = x2d.dtype.itemsize
    w_item = w1.dtype.itemsize
    out_item = jnp.dtype(out_dtype).itemsize

    total_cap = _vmem_total_cap()
    small_bytes = 2 * 1024 * 1024  # b1/b2/w2 tile padding + misc slack
    k_lanes = _round_up(k, 128)
    dim_lanes = _round_up(dim, 128)

    # Resident-W1 VMEM footprint (assume double-buffered, tile-padded).
    w1_resident = 2 * _round_up(k, 8) * dim_lanes * w_item
    use_ktile = force_k_tiling or (w1_resident + small_bytes > total_cap // 2)
    # TODO(synk): ragged latent dims (K not a multiple of 128) fall back to
    # the resident path; real SchizNet latents are multiples of 256.
    use_ktile = use_ktile and (k % 128 == 0) and (k > 128)

    if not use_ktile:
        # ---- resident-weight path: grid over row tiles only -------------
        per_row = 2 * k_lanes * x_item + 2 * 128 * out_item
        x_budget = max(total_cap - w1_resident - small_bytes, 8 * per_row)
        tm = _pick_tile_m(n, per_row, x_budget, tm_max=4096)
        grid = (pl.cdiv(n, tm),)
        in_specs = [
            # Row-tiled activations, default double-buffering; K extent is the
            # true latent_dim (block == full dim), no wrapper pad.
            pl.BlockSpec((tm, k), lambda i: (i, 0)),
            # Weights/biases: constant index_map -> fetched once, resident.
            pl.BlockSpec((k, dim), lambda i: (0, 0)),
            pl.BlockSpec((1, dim), lambda i: (0, 0)),
            pl.BlockSpec((dim, nc), lambda i: (0, 0)),
            pl.BlockSpec((1, nc), lambda i: (0, 0)),
        ]
        out_specs = pl.BlockSpec((tm, nc), lambda i: (i, 0))
        scratch_shapes = []
        kernel = _disc_kernel_resident
        dims = ("parallel",)
        vmem_need = (2 * _round_up(tm, 8) * k_lanes * x_item
                     + w1_resident
                     + 2 * _round_up(tm, 8) * 128 * out_item
                     + small_bytes)
    else:
        # ---- K-tiled path: W1 streamed, f32 accumulator scratch ----------
        tk = _pick_tk(k, tk_target)
        w1_block = 2 * tk * dim_lanes * w_item
        per_row = (2 * tk * x_item          # x double-buffered
                   + 2 * 128 * out_item     # out double-buffered (lane-padded)
                   + dim_lanes * 4)         # f32 accumulator scratch
        x_budget = max(total_cap - w1_block - small_bytes, 8 * per_row)
        tm = _pick_tile_m(n, per_row, x_budget, tm_max=4096)
        grid = (pl.cdiv(n, tm), k // tk)
        in_specs = [
            pl.BlockSpec((tm, tk), lambda i, kk: (i, kk)),
            pl.BlockSpec((tk, dim), lambda i, kk: (kk, 0)),
            pl.BlockSpec((1, dim), lambda i, kk: (0, 0)),
            pl.BlockSpec((dim, nc), lambda i, kk: (0, 0)),
            pl.BlockSpec((1, nc), lambda i, kk: (0, 0)),
        ]
        out_specs = pl.BlockSpec((tm, nc), lambda i, kk: (i, 0))
        scratch_shapes = [pltpu.VMEM((tm, dim), jnp.float32)]
        kernel = _disc_kernel_ktiled
        dims = ("parallel", "arbitrary")
        vmem_need = (2 * _round_up(tm, 8) * tk * x_item
                     + w1_block
                     + 2 * _round_up(tm, 8) * 128 * out_item
                     + _round_up(tm, 8) * dim_lanes * 4
                     + small_bytes)

    vmem_limit = int(max(vmem_need, 32 * 1024 * 1024))

    cost = pl.CostEstimate(
        flops=2 * n * (k * dim + dim * nc),
        transcendentals=0,
        bytes_accessed=int(n * k * x_item + n * nc * out_item
                           + w1.size * w_item + w2.size * w_item
                           + b1.size * 4 + b2.size * 4),
    )

    out = pl.pallas_call(
        kernel,
        out_shape=jax.ShapeDtypeStruct((n, nc), out_dtype),
        grid_spec=pltpu.PrefetchScalarGridSpec(
            num_scalar_prefetch=0,
            grid=grid,
            in_specs=in_specs,
            out_specs=out_specs,
            scratch_shapes=scratch_shapes,
        ),
        compiler_params=pltpu.CompilerParams(
            dimension_semantics=dims,
            vmem_limit_bytes=vmem_limit,
        ),
        cost_estimate=cost,
    )(x2d, w1, b1, w2, b2)

    # torch's x.squeeze(dim=1): only drops dim 1 when its size is 1.
    if nc == 1:
        out = out[:, 0]
    return out


def make_params(key, latent_dim, dim, nb_classes, dtype=jnp.float32):
    """Deterministic synthetic parameters (shapes match the nn.Linear layers).
    Stored already transposed: W has shape (in_features, out_features)."""
    k1, k2, k3, k4 = jax.random.split(key, 4)
    s1 = 1.0 / jnp.sqrt(latent_dim)
    s2 = 1.0 / jnp.sqrt(dim)
    w1 = jax.random.uniform(k1, (latent_dim, dim), dtype, -s1, s1)
    b1 = jax.random.uniform(k2, (1, dim), dtype, -s1, s1)
    w2 = jax.random.uniform(k3, (dim, nb_classes), dtype, -s2, s2)
    b2 = jax.random.uniform(k4, (1, nb_classes), dtype, -s2, s2)
    return w1, b1, w2, b2


if __name__ == "__main__":
    # SchizNet-consistent small shapes: with input_size spatial dims of 16 the
    # encoder output x_enc is (batch, 256, 1, 1, 1), so the classifier is
    # Disc(nb_classes=2, latent_dim=256, dim=64).
    batch = 4
    nb_classes = 2
    latent_dim = 256
    hidden_dim = 64

    key = jax.random.PRNGKey(0)
    kx, kp, kb, kp2, kx2 = jax.random.split(key, 5)
    x_enc = jax.random.normal(kx, (batch, 256, 1, 1, 1), dtype=jnp.float32)
    w1, b1, w2, b2 = make_params(kp, latent_dim, hidden_dim, nb_classes)

    def ref_fn(xr, w1_, b1_, w2_, b2_, ld):
        x2 = jnp.reshape(xr, (-1, ld)).astype(jnp.float32)
        h = x2 @ w1_ + b1_
        h = jnp.where(h > 0, h, 0.2 * h)
        return h @ w2_ + b2_

    # Exact f32 path.
    out_f32 = jax.block_until_ready(
        disc_forward(x_enc, w1, b1, w2, b2, latent_dim=latent_dim,
                     use_bf16=False))
    ref = ref_fn(x_enc, w1, b1, w2, b2, latent_dim)
    assert out_f32.shape == (batch, nb_classes)
    assert jnp.allclose(out_f32, ref, atol=1e-3, rtol=1e-3)

    # Default bf16-matmul path (f32 accumulation): looser tolerance for the
    # bf16 operand rounding.
    out_bf16 = jax.block_until_ready(
        disc_forward(x_enc, w1, b1, w2, b2, latent_dim=latent_dim,
                     use_bf16=True))
    assert out_bf16.shape == (batch, nb_classes)
    assert jnp.allclose(out_bf16, ref, atol=3e-2, rtol=3e-2)

    # Larger batch: exercises the multi-tile row grid (grid >= 2 with a
    # partial final row tile, larger TM from the VMEM budget).
    n_big = 2600
    x_big = jax.random.normal(kb, (n_big, latent_dim), dtype=jnp.float32)
    out_big = jax.block_until_ready(
        disc_forward(x_big, w1, b1, w2, b2, latent_dim=latent_dim,
                     use_bf16=True))
    ref_big = ref_fn(x_big, w1, b1, w2, b2, latent_dim)
    assert out_big.shape == (n_big, nb_classes)
    assert jnp.allclose(out_big, ref_big, atol=3e-2, rtol=3e-2)

    # bf16 activations straight from the producer (no wrapper cast inside
    # disc_forward): halves the dominant HBM read.
    x_big_bf16 = x_big.astype(jnp.bfloat16)
    out_bf_act = jax.block_until_ready(
        disc_forward(x_big_bf16, w1, b1, w2, b2, latent_dim=latent_dim,
                     use_bf16=True))
    ref_bf_act = ref_fn(x_big_bf16, w1, b1, w2, b2, latent_dim)
    assert out_bf_act.shape == (n_big, nb_classes)
    assert jnp.allclose(out_bf_act.astype(jnp.float32), ref_bf_act,
                        atol=6e-2, rtol=6e-2)

    # K-tiled path (forced, small tk) to exercise the accumulator grid that
    # large real-SchizNet latent dims would take on v7x.
    latent_big = 512
    w1b, b1b, w2b, b2b = make_params(kp2, latent_big, hidden_dim, nb_classes)
    x_kt = jax.random.normal(kx2, (300, latent_big), dtype=jnp.float32)
    out_kt = jax.block_until_ready(
        disc_forward(x_kt, w1b, b1b, w2b, b2b, latent_dim=latent_big,
                     use_bf16=True, force_k_tiling=True, tk_target=128))
    ref_kt = ref_fn(x_kt, w1b, b1b, w2b, b2b, latent_big)
    assert out_kt.shape == (300, nb_classes)
    assert jnp.allclose(out_kt, ref_kt, atol=3e-2, rtol=3e-2)

    print("KERNEL_OK")
</pallas_src>

<mosaic_0001>
module attributes {stable_mosaic.version = 11 : i64} {
  func.func @_disc_kernel_resident(%arg0: i32, %arg1: memref<4x256xf32, #tpu.memory_space<vmem>>, %arg2: memref<256x64xf32, #tpu.memory_space<vmem>>, %arg3: memref<1x64xf32, #tpu.memory_space<vmem>>, %arg4: memref<64x2xf32, #tpu.memory_space<vmem>>, %arg5: memref<1x2xf32, #tpu.memory_space<vmem>>, %arg6: memref<4x2xf32, #tpu.memory_space<vmem>>) attributes {dimension_semantics = [#tpu.dimension_semantics<parallel>], iteration_bounds = array<i64: 1>, scalar_prefetch = 0 : i64, scratch_operands = 0 : i64, tpu.core_type = #tpu.core_type<tc>, window_params = [{transform_indices = @transform_0, window_bounds = array<i64: 4, 256>}, {pipeline_mode = #tpu.pipeline_mode<synchronous>, transform_indices = @transform_1, window_bounds = array<i64: 256, 64>}, {pipeline_mode = #tpu.pipeline_mode<synchronous>, transform_indices = @transform_2, window_bounds = array<i64: 1, 64>}, {pipeline_mode = #tpu.pipeline_mode<synchronous>, transform_indices = @transform_3, window_bounds = array<i64: 64, 2>}, {pipeline_mode = #tpu.pipeline_mode<synchronous>, transform_indices = @transform_4, window_bounds = array<i64: 1, 2>}, {transform_indices = @transform_5, window_bounds = array<i64: 4, 2>}]} {
    %c0 = arith.constant 0 : index
    %c0_0 = arith.constant 0 : index
    %0 = vector.load %arg1[%c0, %c0_0] : memref<4x256xf32, #tpu.memory_space<vmem>>, vector<4x256xf32>
    %c0_1 = arith.constant 0 : index
    %c0_2 = arith.constant 0 : index
    %1 = vector.load %arg2[%c0_1, %c0_2] : memref<256x64xf32, #tpu.memory_space<vmem>>, vector<256x64xf32>
    %cst = arith.constant dense<0.000000e+00> : vector<4x64xf32>
    %2 = tpu.matmul %0, %1, %cst {dimension_numbers = #tpu.dot_dimension_numbers<[1], [0], [0], [1], [0, 0, 1, 1], [], []>} : vector<4x256xf32>, vector<256x64xf32>, vector<4x64xf32> -> vector<4x64xf32>
    %c0_3 = arith.constant 0 : index
    %c0_4 = arith.constant 0 : index
    %3 = vector.load %arg3[%c0_3, %c0_4] : memref<1x64xf32, #tpu.memory_space<vmem>>, vector<1x64xf32>
    %4 = vector.broadcast %3 : vector<1x64xf32> to vector<4x64xf32>
    %5 = arith.addf %2, %4 : vector<4x64xf32>
    %cst_5 = arith.constant 2.000000e-01 : f32
    %6 = vector.broadcast %cst_5 : f32 to vector<4x64xf32>
    %7 = arith.mulf %6, %5 : vector<4x64xf32>
    %8 = arith.maximumf %5, %7 : vector<4x64xf32>
    %c0_6 = arith.constant 0 : index
    %c0_7 = arith.constant 0 : index
    %9 = vector.load %arg4[%c0_6, %c0_7] : memref<64x2xf32, #tpu.memory_space<vmem>>, vector<64x2xf32>
    %cst_8 = arith.constant dense<0.000000e+00> : vector<4x2xf32>
    %10 = tpu.matmul %8, %9, %cst_8 {dimension_numbers = #tpu.dot_dimension_numbers<[1], [0], [0], [1], [0, 0, 1, 1], [], []>} : vector<4x64xf32>, vector<64x2xf32>, vector<4x2xf32> -> vector<4x2xf32>
    %c0_9 = arith.constant 0 : index
    %c0_10 = arith.constant 0 : index
    %11 = vector.load %arg5[%c0_9, %c0_10] : memref<1x2xf32, #tpu.memory_space<vmem>>, vector<1x2xf32>
    %12 = vector.broadcast %11 : vector<1x2xf32> to vector<4x2xf32>
    %13 = arith.addf %10, %12 : vector<4x2xf32>
    %c0_11 = arith.constant 0 : index
    %c0_12 = arith.constant 0 : index
    %14 = vector.load %arg6[%c0_11, %c0_12] : memref<4x2xf32, #tpu.memory_space<vmem>>, vector<4x2xf32>
    tpu.vector_store %arg6[%c0_11, %c0_12], %13 {strides = array<i32>} : memref<4x2xf32, #tpu.memory_space<vmem>>, vector<4x2xf32>,
    return
  }
  func.func @transform_0(%arg0: i32) -> (i32, i32) {
    %c0_i32 = arith.constant 0 : i32
    %c0_i32_0 = arith.constant 0 : i32
    return %arg0, %c0_i32 : i32, i32
  }
  func.func @transform_1(%arg0: i32) -> (i32, i32) {
    %c0_i32 = arith.constant 0 : i32
    %c0_i32_0 = arith.constant 0 : i32
    %c0_i32_1 = arith.constant 0 : i32
    return %c0_i32, %c0_i32_0 : i32, i32
  }
  func.func @transform_2(%arg0: i32) -> (i32, i32) {
    %c0_i32 = arith.constant 0 : i32
    %c0_i32_0 = arith.constant 0 : i32
    %c0_i32_1 = arith.constant 0 : i32
    return %c0_i32, %c0_i32_0 : i32, i32
  }
  func.func @transform_3(%arg0: i32) -> (i32, i32) {
    %c0_i32 = arith.constant 0 : i32
    %c0_i32_0 = arith.constant 0 : i32
    %c0_i32_1 = arith.constant 0 : i32
    return %c0_i32, %c0_i32_0 : i32, i32
  }
  func.func @transform_4(%arg0: i32) -> (i32, i32) {
    %c0_i32 = arith.constant 0 : i32
    %c0_i32_0 = arith.constant 0 : i32
    %c0_i32_1 = arith.constant 0 : i32
    return %c0_i32, %c0_i32_0 : i32, i32
  }
  func.func @transform_5(%arg0: i32) -> (i32, i32) {
    %c0_i32 = arith.constant 0 : i32
    %c0_i32_0 = arith.constant 0 : i32
    return %arg0, %c0_i32 : i32, i32
  }
}

</mosaic_0001>

<llo_original>
// kernel: tpu_custom_call.1
$region0: #{tpu_custom_call.1}
  #allocation0 [shape = 'u32[]', space=smem, size = 0x4, offset = 0x4, fixed_abs, tag = 'smem constant byte address 0x4 - core index']
  #allocation1 [shape = 'u32[144,128]{1,0:T(1,128)}', space=vmem, size = 0x12000, scoped, tag = 'internal scratch']
  %s0 = inlined_call_operand.vmem [shape: f32[4,256], index: 0, kind: input, shape index: {}]
  %s1 = inlined_call_operand.vmem [shape: f32[256,64], index: 1, kind: input, shape index: {}]
  %s2 = inlined_call_operand.vmem [shape: f32[1,64], index: 2, kind: input, shape index: {}]
  %s3 = inlined_call_operand.vmem [shape: f32[64,2], index: 3, kind: input, shape index: {}]
  %s4 = inlined_call_operand.vmem [shape: f32[1,2], index: 4, kind: input, shape index: {}]
  %s5 = inlined_call_operand.vmem [shape: f32[4,2], index: 5, kind: output, shape index: {}]
  %s6 = sld [smem:[#allocation0]]
  $region30: #{tpu_custom_call.1} parent=0
    _
  %s8 = ssub.s32 1, %s6
  %s9 = scalar_select 0, %s8, %s6
  // Predicated region
  $region2: #{tpu_custom_call.1} parent=0 // pred_check
    _
  $region3: #{tpu_custom_call.1} parent=0 // pred_check_branch
    %11 = sbr.rel (0) target = $region5
  $region4: #{tpu_custom_call.1} parent=0 // pred_region
    _
  $region5: #{tpu_custom_call.1} parent=0 // pred_fallthru
    _
  // Predicated region
  $region6: #{tpu_custom_call.1} parent=0 // pred_check
    _
  $region7: #{tpu_custom_call.1} parent=0 // pred_check_branch
    %13 = sbr.rel (0) target = $region9
  $region8: #{tpu_custom_call.1} parent=0 // pred_region
    _
  $region9: #{tpu_custom_call.1} parent=0 // pred_fallthru
    _
  // Predicated region
  $region10: #{tpu_custom_call.1} parent=0 // pred_check
    _
  $region11: #{tpu_custom_call.1} parent=0 // pred_check_branch
    %15 = sbr.rel (0) target = $region13
  $region12: #{tpu_custom_call.1} parent=0 // pred_region
    _
  $region13: #{tpu_custom_call.1} parent=0 // pred_fallthru
    _
  // Predicated region
  $region14: #{tpu_custom_call.1} parent=0 // pred_check
    _
  $region15: #{tpu_custom_call.1} parent=0 // pred_check_branch
    %17 = sbr.rel (0) target = $region17
  $region16: #{tpu_custom_call.1} parent=0 // pred_region
    _
  $region17: #{tpu_custom_call.1} parent=0 // pred_fallthru
    _
  // Predicated region
  $region18: #{tpu_custom_call.1} parent=0 // pred_check
    _
  $region19: #{tpu_custom_call.1} parent=0 // pred_check_branch
    %19 = sbr.rel (0) target = $region21
  $region20: #{tpu_custom_call.1} parent=0 // pred_region
    _
  $region21: #{tpu_custom_call.1} parent=0 // pred_fallthru
    _
  %v20 = vld [vmem:[%s0] sm:$0xff]
  %v21 = vld [vmem:[%s1] sm:$0xff]
  %v22 = vld [vmem:[%s1 + $0x8] sm:$0xff]
  %v23 = vld [vmem:[%s1 + $0x10] sm:$0xff]
  %v24 = vld [vmem:[%s1 + $0x18] sm:$0xff]
  %v25 = vld [vmem:[%s1 + $0x20] sm:$0xff]
  %v26 = vld [vmem:[%s1 + $0x28] sm:$0xff]
  %v27 = vld [vmem:[%s1 + $0x30] sm:$0xff]
  %v28 = vld [vmem:[%s1 + $0x38] sm:$0xff]
  %v29 = vld [vmem:[%s1 + $0x40] sm:$0xff]
  %v30 = vld [vmem:[%s1 + $0x48] sm:$0xff]
  %v31 = vld [vmem:[%s1 + $0x50] sm:$0xff]
  %v32 = vld [vmem:[%s1 + $0x58] sm:$0xff]
  %v33 = vld [vmem:[%s1 + $0x60] sm:$0xff]
  %v34 = vld [vmem:[%s1 + $0x68] sm:$0xff]
  %v35 = vld [vmem:[%s1 + $0x70] sm:$0xff]
  %v36 = vld [vmem:[%s1 + $0x78] sm:$0xff]
  %v37 = vld [vmem:[%s1 + $0x80] sm:$0xff]
  %v38 = vld [vmem:[%s1 + $0x88] sm:$0xff]
  %v39 = vld [vmem:[%s1 + $0x90] sm:$0xff]
  %v40 = vld [vmem:[%s1 + $0x98] sm:$0xff]
  %v41 = vld [vmem:[%s1 + $0xa0] sm:$0xff]
  %v42 = vld [vmem:[%s1 + $0xa8] sm:$0xff]
  %v43 = vld [vmem:[%s1 + $0xb0] sm:$0xff]
  %v44 = vld [vmem:[%s1 + $0xb8] sm:$0xff]
  %v45 = vld [vmem:[%s1 + $0xc0] sm:$0xff]
  %v46 = vld [vmem:[%s1 + $0xc8] sm:$0xff]
  %v47 = vld [vmem:[%s1 + $0xd0] sm:$0xff]
  %v48 = vld [vmem:[%s1 + $0xd8] sm:$0xff]
  %v49 = vld [vmem:[%s1 + $0xe0] sm:$0xff]
  %v50 = vld [vmem:[%s1 + $0xe8] sm:$0xff]
  %v51 = vld [vmem:[%s1 + $0xf0] sm:$0xff]
  %v52 = vld [vmem:[%s1 + $0xf8] sm:$0xff]
  %v53 = vld [vmem:[%s2] sm:$0x1]
  %v55 = vlaneseq
  %v56 = vshrl.u32 %v55, 7
  %v57 = vsub.s32 0, %v56
  %v58 = vrot.slane %v53, %v57
  %v61 = vcombine.high %v20, %v20
  %63 = vmatprep.subr.mxu0 0.0
  %64 = vmatpush1.msra.mxu0 %v36
  %65 = vmatprep.subr.mxu0 0.0
  %66 = vmatpush1.msra.mxu0 %v35
  %67 = vmatprep.subr.mxu0 0.0
  %68 = vmatpush1.msra.mxu0 %v34
  %69 = vmatprep.subr.mxu0 0.0
  %70 = vmatpush1.msra.mxu0 %v33
  %71 = vmatprep.subr.mxu0 0.0
  %72 = vmatpush1.msra.mxu0 %v32
  %73 = vmatprep.subr.mxu0 0.0
  %74 = vmatpush1.msra.mxu0 %v31
  %75 = vmatprep.subr.mxu0 0.0
  %76 = vmatpush1.msra.mxu0 %v30
  %77 = vmatprep.subr.mxu0 0.0
  %78 = vmatpush1.msra.mxu0 %v29
  %79 = vmatprep.subr.mxu0 0.0
  %80 = vmatpush1.msra.mxu0 %v28
  %81 = vmatprep.subr.mxu0 0.0
  %82 = vmatpush1.msra.mxu0 %v27
  %83 = vmatprep.subr.mxu0 0.0
  %84 = vmatpush1.msra.mxu0 %v26
  %85 = vmatprep.subr.mxu0 0.0
  %86 = vmatpush1.msra.mxu0 %v25
  %87 = vmatprep.subr.mxu0 0.0
  %88 = vmatpush1.msra.mxu0 %v24
  %89 = vmatprep.subr.mxu0 0.0
  %90 = vmatpush1.msra.mxu0 %v23
  %91 = vmatprep.subr.mxu0 0.0
  %92 = vmatpush1.msra.mxu0 %v22
  %93 = vmatprep.subr.mxu0 0.0
  %94 = vmatpush1.msra.mxu0 %v21
  %95 = vmatprep.subr.mxu0 0.0
  %96 = vmatpush2.msra.mxu0 %v52
  %97 = vmatprep.subr.mxu0 0.0
  %98 = vmatpush2.msra.mxu0 %v51
  %99 = vmatprep.subr.mxu0 0.0
  %100 = vmatpush2.msra.mxu0 %v50
  %101 = vmatprep.subr.mxu0 0.0
  %102 = vmatpush2.msra.mxu0 %v49
  %103 = vmatprep.subr.mxu0 0.0
  %104 = vmatpush2.msra.mxu0 %v48
  %105 = vmatprep.subr.mxu0 0.0
  %106 = vmatpush2.msra.mxu0 %v47
  %107 = vmatprep.subr.mxu0 0.0
  %108 = vmatpush2.msra.mxu0 %v46
  %109 = vmatprep.subr.mxu0 0.0
  %110 = vmatpush2.msra.mxu0 %v45
  %111 = vmatprep.subr.mxu0 0.0
  %112 = vmatpush2.msra.mxu0 %v44
  %113 = vmatprep.subr.mxu0 0.0
  %114 = vmatpush2.msra.mxu0 %v43
  %115 = vmatprep.subr.mxu0 0.0
  %116 = vmatpush2.msra.mxu0 %v42
  %117 = vmatprep.subr.mxu0 0.0
  %118 = vmatpush2.msra.mxu0 %v41
  %119 = vmatprep.subr.mxu0 0.0
  %120 = vmatpush2.msra.mxu0 %v40
  %121 = vmatprep.subr.mxu0 0.0
  %122 = vmatpush2.msra.mxu0 %v39
  %123 = vmatprep.subr.mxu0 0.0
  %124 = vmatpush2.msra.mxu0 %v38
  %125 = vmatprep.subr.mxu0 0.0
  %126 = vmatpush2.msra.mxu0 %v37
  %127 = vmatprep.mubr.f32.mxu0 %v61
  %128 = vmatmul.mubr.f32.gmra.mxu0 %v20
  %v129 = vpop.f32.mrf.mxu0
  %v130 = vadd.f32 %v58, %v129
  %v131 = vpop.f32.mrf.mxu0
  %132 = vdwg.mxu0
  %v133 = vmul.f32 %v130, 0.2
  %v134 = vmax.f32 %v130, %v133
  %v135 = vld [vmem:[%s3] sm:$0xff]
  %v136 = vld [vmem:[%s3 + $0x8] sm:$0xff]
  %v137 = vld [vmem:[%s3 + $0x10] sm:$0xff]
  %v138 = vld [vmem:[%s3 + $0x18] sm:$0xff]
  %v139 = vld [vmem:[%s3 + $0x20] sm:$0xff]
  %v140 = vld [vmem:[%s3 + $0x28] sm:$0xff]
  %v141 = vld [vmem:[%s3 + $0x30] sm:$0xff]
  %v142 = vld [vmem:[%s3 + $0x38] sm:$0xff]
  %v143 = vld [vmem:[%s4] sm:$0x1]
  %v145 = vlaneseq
  %v146 = vshrl.u32 %v145, 7
  %v147 = vsub.s32 0, %v146
  %v148 = vrot.slane %v143, %v147
  %vm150 = vcmask 523264
  %v152 = vsel %vm150, %v134, 0
  %154 = vmatprep.subr.mxu0 0.0
  %155 = vmatpush1.msra.mxu0 0.0
  %156 = vmatprep.subr.mxu0 0.0
  %157 = vmatpush1.msra.mxu0 0.0
  %158 = vmatprep.subr.mxu0 0.0
  %159 = vmatpush1.msra.mxu0 0.0
  %160 = vmatprep.subr.mxu0 0.0
  %161 = vmatpush1.msra.mxu0 0.0
  %162 = vmatprep.subr.mxu0 0.0
  %163 = vmatpush1.msra.mxu0 0.0
  %164 = vmatprep.subr.mxu0 0.0
  %165 = vmatpush1.msra.mxu0 0.0
  %166 = vmatprep.subr.mxu0 0.0
  %167 = vmatpush1.msra.mxu0 0.0
  %168 = vmatprep.subr.mxu0 0.0
  %169 = vmatpush1.msra.mxu0 0.0
  %170 = vmatprep.subr.mxu0 0.0
  %171 = vmatpush1.msra.mxu0 %v142
  %172 = vmatprep.subr.mxu0 0.0
  %173 = vmatpush1.msra.mxu0 %v141
  %174 = vmatprep.subr.mxu0 0.0
  %175 = vmatpush1.msra.mxu0 %v140
  %176 = vmatprep.subr.mxu0 0.0
  %177 = vmatpush1.msra.mxu0 %v139
  %178 = vmatprep.subr.mxu0 0.0
  %179 = vmatpush1.msra.mxu0 %v138
  %180 = vmatprep.subr.mxu0 0.0
  %181 = vmatpush1.msra.mxu0 %v137
  %182 = vmatprep.subr.mxu0 0.0
  %183 = vmatpush1.msra.mxu0 %v136
  %184 = vmatprep.subr.mxu0 0.0
  %185 = vmatpush1.msra.mxu0 %v135
  %186 = vmatprep.subr.mxu0 0.0
  %187 = vmatpush2.msra.mxu0 0.0
  %188 = vmatprep.subr.mxu0 0.0
  %189 = vmatpush2.msra.mxu0 0.0
  %190 = vmatprep.subr.mxu0 0.0
  %191 = vmatpush2.msra.mxu0 0.0
  %192 = vmatprep.subr.mxu0 0.0
  %193 = vmatpush2.msra.mxu0 0.0
  %194 = vmatprep.subr.mxu0 0.0
  %195 = vmatpush2.msra.mxu0 0.0
  %196 = vmatprep.subr.mxu0 0.0
  %197 = vmatpush2.msra.mxu0 0.0
  %198 = vmatprep.subr.mxu0 0.0
  %199 = vmatpush2.msra.mxu0 0.0
  %200 = vmatprep.subr.mxu0 0.0
  %201 = vmatpush2.msra.mxu0 0.0
  %202 = vmatprep.subr.mxu0 0.0
  %203 = vmatpush2.msra.mxu0 0.0
  %204 = vmatprep.subr.mxu0 0.0
  %205 = vmatpush2.msra.mxu0 0.0
  %206 = vmatprep.subr.mxu0 0.0
  %207 = vmatpush2.msra.mxu0 0.0
  %208 = vmatprep.subr.mxu0 0.0
  %209 = vmatpush2.msra.mxu0 0.0
  %210 = vmatprep.subr.mxu0 0.0
  %211 = vmatpush2.msra.mxu0 0.0
  %212 = vmatprep.subr.mxu0 0.0
  %213 = vmatpush2.msra.mxu0 0.0
  %214 = vmatprep.subr.mxu0 0.0
  %215 = vmatpush2.msra.mxu0 0.0
  %216 = vmatprep.subr.mxu0 0.0
  %217 = vmatpush2.msra.mxu0 0.0
  %218 = vmatprep.mubr.f32.mxu0 0.0
  %219 = vmatmul.mubr.f32.gmra.mxu0 %v152
  %v220 = vpop.f32.mrf.mxu0
  %v221 = vadd.f32 %v148, %v220
  %v222 = vpop.f32.mrf.mxu0
  %223 = vdwg.mxu0
  %vm224 = vcmask 11264
  %225 = vst.msk [vmem:[%s5] sm:$0xf] %vm224, %v221
  // Predicated region
  $region22: #{tpu_custom_call.1} parent=0 // pred_check
    _
  $region23: #{tpu_custom_call.1} parent=0 // pred_check_branch
    %227 = sbr.rel (0) target = $region25
  $region24: #{tpu_custom_call.1} parent=0 // pred_region
    _
  $region25: #{tpu_custom_call.1} parent=0 // pred_fallthru
    _
  // Predicated region
  $region26: #{tpu_custom_call.1} parent=0 // pred_check
    _
  $region27: #{tpu_custom_call.1} parent=0 // pred_check_branch
    %229 = sbr.rel (0) target = $region29
  $region28: #{tpu_custom_call.1} parent=0 // pred_region
    _
  $region29: #{tpu_custom_call.1} parent=0 // pred_fallthru
    _

</llo_original>
